<compile_context>
chip_gen: v7x
topology: tpu7x:2x2x1
jax: 0.10.0
libtpu: 0.0.40
codegen_flags: <defaults>
</compile_context>

<pallas_src>
import jax
import jax.numpy as jnp
from jax.experimental import pallas as pl
from jax.experimental.pallas import tpu as pltpu


def _round_up(x, m):
    return (x + m - 1) // m * m


def _logreg_kernel(x_ref, wt_ref, o_ref):
    # x_ref: (tb, dim), wt_ref: (dim, num)  ->  o_ref: (tb, num)
    o_ref[...] = jnp.dot(
        x_ref[...], wt_ref[...], preferred_element_type=jnp.float32
    ).astype(o_ref.dtype)


def logistic_reg_forward(x, w, *, tb_max=8192, min_pallas_batch=1024):
    """x: (batch, dim) f32, w: (num, dim) f32  ->  (batch, num) f32."""
    batch, dim = x.shape
    num, dim_w = w.shape
    assert dim == dim_w

    # Small-problem fast path: kernel launch + pipelining overhead dominates
    # at tiny batch; a fused XLA dot wins. (Set min_pallas_batch=0 to force
    # the Pallas path, e.g. for testing.)
    if batch < min_pallas_batch:
        return jnp.matmul(x, w.T)

    # One-time transpose of the tiny resident weight: (num, dim) -> (dim, num).
    w_t = w.T

    # Batch tile: multiple of 8 (sublane), capped at tb_max. No batch padding:
    # the last grid block may be ragged; Pallas masks its output stores.
    tb = min(_round_up(batch, 8), tb_max)
    grid = (pl.cdiv(batch, tb),)

    return pl.pallas_call(
        _logreg_kernel,
        out_shape=jax.ShapeDtypeStruct((batch, num), x.dtype),
        grid_spec=pl.GridSpec(
            grid=grid,
            in_specs=[
                # x: one batch tile per grid step (last block ragged if needed)
                pl.BlockSpec((tb, dim), lambda i: (i, 0)),
                # w.T: full (dim, num) weight resident across all batch tiles
                pl.BlockSpec((dim, num), lambda i: (0, 0)),
            ],
            # Output block last dim == full array dim (num) -> legal, unpadded.
            out_specs=pl.BlockSpec((tb, num), lambda i: (i, 0)),
        ),
        compiler_params=pltpu.CompilerParams(
            dimension_semantics=("parallel",),
        ),
    )(x, w_t)


if __name__ == "__main__":
    # Module config:  LogisticReg(dim=32, num=16).
    dim, num = 32, 16

    key = jax.random.PRNGKey(0)
    kw, kx_small, kx_big = jax.random.split(key, 3)

    # Deterministic parameter init (weights_init in pfbayes re-inits the
    # Parameter with a normal); synthetic, no checkpoint load.
    w = 0.1 * jax.random.normal(kw, (num, dim), dtype=jnp.float32)

    # 1) Small batch -> fast path (plain fused XLA dot, no Pallas launch).
    x_small = jax.random.normal(kx_small, (8, dim), dtype=jnp.float32)
    y_small = jax.block_until_ready(logistic_reg_forward(x_small, w))
    assert y_small.shape == (8, num)
    assert jnp.allclose(y_small, x_small @ w.T, atol=1e-4, rtol=1e-4)

    # 2) Pallas path, forced, with several grid blocks and a ragged last
    #    block (batch=300 is not a multiple of tb=128), exercising the
    #    cdiv-grid boundary masking of output stores.
    batch = 300
    x = jax.random.normal(kx_big, (batch, dim), dtype=jnp.float32)
    y = logistic_reg_forward(x, w, tb_max=128, min_pallas_batch=0)
    y = jax.block_until_ready(y)
    assert y.shape == (batch, num)
    assert jnp.allclose(y, x @ w.T, atol=1e-4, rtol=1e-4)

    print("KERNEL_OK")
</pallas_src>

<mosaic_0001>
module attributes {stable_mosaic.version = 11 : i64} {
  func.func @_logreg_kernel(%arg0: i32, %arg1: memref<128x32xf32, #tpu.memory_space<vmem>>, %arg2: memref<32x16xf32, #tpu.memory_space<vmem>>, %arg3: memref<128x16xf32, #tpu.memory_space<vmem>>) attributes {dimension_semantics = [#tpu.dimension_semantics<parallel>], iteration_bounds = array<i64: 3>, scalar_prefetch = 0 : i64, scratch_operands = 0 : i64, tpu.core_type = #tpu.core_type<tc>, window_params = [{transform_indices = @transform_0, window_bounds = array<i64: 128, 32>}, {pipeline_mode = #tpu.pipeline_mode<synchronous>, transform_indices = @transform_1, window_bounds = array<i64: 32, 16>}, {transform_indices = @transform_2, window_bounds = array<i64: 128, 16>}]} {
    %c0 = arith.constant 0 : index
    %c0_0 = arith.constant 0 : index
    %0 = vector.load %arg1[%c0, %c0_0] : memref<128x32xf32, #tpu.memory_space<vmem>>, vector<128x32xf32>
    %c0_1 = arith.constant 0 : index
    %c0_2 = arith.constant 0 : index
    %1 = vector.load %arg2[%c0_1, %c0_2] : memref<32x16xf32, #tpu.memory_space<vmem>>, vector<32x16xf32>
    %cst = arith.constant dense<0.000000e+00> : vector<128x16xf32>
    %2 = tpu.matmul %0, %1, %cst {dimension_numbers = #tpu.dot_dimension_numbers<[1], [0], [0], [1], [0, 0, 1, 1], [], []>} : vector<128x32xf32>, vector<32x16xf32>, vector<128x16xf32> -> vector<128x16xf32>
    %c0_3 = arith.constant 0 : index
    %c0_4 = arith.constant 0 : index
    %3 = vector.load %arg3[%c0_3, %c0_4] : memref<128x16xf32, #tpu.memory_space<vmem>>, vector<128x16xf32>
    tpu.vector_store %arg3[%c0_3, %c0_4], %2 {strides = array<i32>} : memref<128x16xf32, #tpu.memory_space<vmem>>, vector<128x16xf32>,
    return
  }
  func.func @transform_0(%arg0: i32) -> (i32, i32) {
    %c0_i32 = arith.constant 0 : i32
    %c0_i32_0 = arith.constant 0 : i32
    return %arg0, %c0_i32 : i32, i32
  }
  func.func @transform_1(%arg0: i32) -> (i32, i32) {
    %c0_i32 = arith.constant 0 : i32
    %c0_i32_0 = arith.constant 0 : i32
    %c0_i32_1 = arith.constant 0 : i32
    return %c0_i32, %c0_i32_0 : i32, i32
  }
  func.func @transform_2(%arg0: i32) -> (i32, i32) {
    %c0_i32 = arith.constant 0 : i32
    %c0_i32_0 = arith.constant 0 : i32
    return %arg0, %c0_i32 : i32, i32
  }
}

</mosaic_0001>

<llo_original>
// kernel: tpu_custom_call.1
$region0: #{tpu_custom_call.1}
  #allocation0 [shape = 'u32[]', space=smem, size = 0x4, offset = 0x4, fixed_abs, tag = 'smem constant byte address 0x4 - core index']
  #allocation1 [shape = 'u32[144,128]{1,0:T(1,128)}', space=vmem, size = 0x12000, scoped, tag = 'internal scratch']
  %s0 = inlined_call_operand.vmem [shape: f32[300,32], index: 0, kind: input, shape index: {}]
  %s1 = inlined_call_operand.vmem [shape: f32[32,16], index: 1, kind: input, shape index: {}]
  %s2 = inlined_call_operand.vmem [shape: f32[300,16], index: 2, kind: output, shape index: {}]
  %s3 = sld [smem:[#allocation0]]
  $region89: #{tpu_custom_call.1} parent=0
    _
  %s5 = ssub.s32 1, %s3
  %s6 = scalar_select 0, %s5, %s3
  $region1: #{tpu_custom_call.1} parent=0
    #allocation2 [shape = 'u8[131072]{0}', space=vmem, size = 0x20000, scoped, tag = 'output window, operand 0']
    loop: start=0, step=1, limit=5
    $region2: #{tpu_custom_call.1} parent=1 // loop_pre_header
      _
    $region3: #{tpu_custom_call.1} parent=1 // loop_header
      %s8 = sphi 0, %s12
      %p9 = scmp.ge.s32.totalorder %s8, 5
      %s18 = sphi 0, %s20
      %s21 = sphi 0, %s18
      %s22 = sphi 0, %s21
      %s38 = sphi 0, %s22
      %s42 = sphi 0, %s42
      %s44 = sphi 0, %s42
      %s45 = sphi 0, %s44
      %s59 = sphi 0, %s45
      %s65 = sphi 0, %s67
      %s68 = sphi 0, %s65
      %s69 = sphi 0, %s68
      %s85 = sphi 0, %s69
    $region4: #{tpu_custom_call.1} parent=1 // loop_header_branch
      %11 = sbr.rel (%p9) target = $region8
    $region5: #{tpu_custom_call.1} parent=1 // loop_body
      %s13 = ssub.s32 %s8, 1
      %s14 = ssub.s32 %s8, 2
      %s15 = sadd.s32 %s8, 1
      %s16 = ssub.s32 %s8, %s15
      %p17 = scmp.eq.s32.totalorder %s16, 0
      %s19 = sadd.s32 %s18, 1
      %s20 = scalar_select %p17, %s18, %s19
      %p23 = pneg %p17
      %p24 = scmp.eq.s32.totalorder %s8, 2
      %p25 = por %p23, %p24
      %p26 = scmp.ne.s32.totalorder %s18, %s21
      %p27 = scmp.eq.s32.totalorder %s8, 0
      %p28 = por %p26, %p27
      %p29 = scmp.ne.s32.totalorder %s18, %s21
      %p30 = scmp.eq.s32.totalorder %s13, 2
      %p31 = por %p29, %p30
      %p32 = scmp.ne.s32.totalorder %s21, %s22
      %p33 = scmp.eq.s32.totalorder %s13, 0
      %p34 = por %p32, %p33
      %p35 = scmp.ne.s32.totalorder %s21, %s22
      %p36 = scmp.eq.s32.totalorder %s14, 2
      %p37 = por %p35, %p36
      %p39 = scmp.ne.s32.totalorder %s22, %s38
      %p40 = scmp.eq.s32.totalorder %s14, 0
      %p41 = por %p39, %p40
      %s43 = sadd.s32 %s42, 1
      %p46 = scmp.eq.s32.totalorder %s8, 2
      %p47 = scmp.ne.s32.totalorder %s42, %s44
      %p48 = scmp.eq.s32.totalorder %s8, 0
      %p49 = por %p47, %p48
      %p50 = scmp.ne.s32.totalorder %s42, %s44
      %p51 = scmp.eq.s32.totalorder %s13, 2
      %p52 = por %p50, %p51
      %p53 = scmp.ne.s32.totalorder %s44, %s45
      %p54 = scmp.eq.s32.totalorder %s13, 0
      %p55 = por %p53, %p54
      %p56 = scmp.ne.s32.totalorder %s44, %s45
      %p57 = scmp.eq.s32.totalorder %s14, 2
      %p58 = por %p56, %p57
      %p60 = scmp.ne.s32.totalorder %s45, %s59
      %p61 = scmp.eq.s32.totalorder %s14, 0
      %p62 = por %p60, %p61
      %s63 = ssub.s32 %s8, %s15
      %p64 = scmp.eq.s32.totalorder %s63, 0
      %s66 = sadd.s32 %s65, 1
      %s67 = scalar_select %p64, %s65, %s66
      %p70 = pneg %p64
      %p71 = scmp.eq.s32.totalorder %s8, 2
      %p72 = por %p70, %p71
      %p73 = scmp.ne.s32.totalorder %s65, %s68
      %p74 = scmp.eq.s32.totalorder %s8, 0
      %p75 = por %p73, %p74
      %p76 = scmp.ne.s32.totalorder %s65, %s68
      %p77 = scmp.eq.s32.totalorder %s13, 2
      %p78 = por %p76, %p77
      %p79 = scmp.ne.s32.totalorder %s68, %s69
      %p80 = scmp.eq.s32.totalorder %s13, 0
      %p81 = por %p79, %p80
      %p82 = scmp.ne.s32.totalorder %s68, %s69
      %p83 = scmp.eq.s32.totalorder %s14, 2
      %p84 = por %p82, %p83
      %p86 = scmp.ne.s32.totalorder %s69, %s85
      %p87 = scmp.eq.s32.totalorder %s14, 0
      %p88 = por %p86, %p87
      %p89 = scmp.le.s32.totalorder 1, %s8
      %p90 = scmp.lt.s32.totalorder %s8, 4
      %p91 = pnand %p89, %p90
      %p92 = pneg %p91
      // Predicated region
      $region9: #{tpu_custom_call.1} parent=5 // pred_check
        _
      $region10: #{tpu_custom_call.1} parent=5 // pred_check_branch
        %94 = sbr.rel (%p91) target = $region12
      $region11: #{tpu_custom_call.1} parent=5 // pred_region
        %s95 = ssub.s32 %s8, 1
        // Predicated region
        $region13: #{tpu_custom_call.1} parent=11 // pred_check
          %p96 = pneg %p55
        $region14: #{tpu_custom_call.1} parent=11 // pred_check_branch
          %98 = sbr.rel (%p96) target = $region16
        $region15: #{tpu_custom_call.1} parent=11 // pred_region
          _
        $region16: #{tpu_custom_call.1} parent=11 // pred_fallthru
          _
      $region12: #{tpu_custom_call.1} parent=5 // pred_fallthru
        _
      %p99 = scmp.lt.s32.totalorder %s8, 3
      // Predicated region
      $region17: #{tpu_custom_call.1} parent=5 // pred_check
        %p100 = pneg %p99
      $region18: #{tpu_custom_call.1} parent=5 // pred_check_branch
        %102 = sbr.rel (%p100) target = $region20
      $region19: #{tpu_custom_call.1} parent=5 // pred_region
        // Predicated region
        $region21: #{tpu_custom_call.1} parent=19 // pred_check
          %p103 = pneg %p28
        $region22: #{tpu_custom_call.1} parent=19 // pred_check_branch
          %105 = sbr.rel (%p103) target = $region24
        $region23: #{tpu_custom_call.1} parent=19 // pred_region
          %s106 = smul.u32 16, %s8
          %s107 = ssub.s32 38, %s106
          %p108 = scmp.lt.s32.totalorder %s107, 16
          %s109 = scalar_select %p108, %s107, 16
          %s110 = smul.u32 128, %s109
          %p111 = scmp.lt.s32.totalorder %s106, 37
          %s112 = scalar_select %p111, %s106, 37
          %s113 = smul.addr %s112, 8
          %s114 = scalar_lea.vmem %s0, %s113
          %s115 = smul.u32 16, %s8
          %s116 = ssub.s32 38, %s115
          %p117 = scmp.lt.s32.totalorder %s116, 16
          %s118 = scalar_select %p117, %s116, 16
          %s119 = smul.u32 128, %s118
        $region24: #{tpu_custom_call.1} parent=19 // pred_fallthru
          _
      $region20: #{tpu_custom_call.1} parent=5 // pred_fallthru
        _
      %p120 = scmp.le.s32.totalorder 1, %s8
      %p121 = scmp.lt.s32.totalorder %s8, 4
      %p122 = pnand %p120, %p121
      %p123 = pneg %p122
      // Predicated region
      $region25: #{tpu_custom_call.1} parent=5 // pred_check
        _
      $region26: #{tpu_custom_call.1} parent=5 // pred_check_branch
        %125 = sbr.rel (%p122) target = $region28
      $region27: #{tpu_custom_call.1} parent=5 // pred_region
        %s126 = ssub.s32 %s8, 1
        %s127 = smul.u32 16, %s13
        %s128 = ssub.s32 38, %s127
        %p129 = scmp.lt.s32.totalorder %s128, 16
        %s130 = scalar_select %p129, %s128, 16
        %s131 = smul.u32 128, %s130
        %p132 = scmp.lt.s32.totalorder %s127, 37
        %s133 = scalar_select %p132, %s127, 37
        %s134 = smul.addr %s133, 8
        %s135 = scalar_lea.vmem %s0, %s134
        %p136 = pneg %p34
        %p137 = pneg %p31
        %p138 = pneg %p55
        %p139 = pneg %p52
        %p140 = pneg %p81
        %p141 = pneg %p78
        %s142 = sand.u32 %s68, 1
        %s143 = sand.u32 %s68, 1
        %s144 = smul.addr %s143, 128
        %s145 = scalar_lea.vmem [#allocation2], %s144
        %s146 = smul.u32 16, %s13
        %s147 = ssub.s32 38, %s146
        %p148 = scmp.lt.s32.totalorder %s147, 16
        %s149 = scalar_select %p148, %s147, 16
        %s150 = smul.u32 128, %s149
        %p151 = scmp.lt.s32.totalorder %s146, 37
        %s152 = scalar_select %p151, %s146, 37
        %s153 = smul.addr %s152, 8
        %s154 = scalar_lea.vmem %s0, %s153
        %s155 = smul.u32 16, %s13
        %s156 = ssub.s32 38, %s155
        %p157 = scmp.lt.s32.totalorder %s156, 16
        %s158 = scalar_select %p157, %s156, 16
        %s159 = smul.u32 128, %s158
        %s160 = smul.u32 16, %s13
        %s161 = ssub.s32 38, %s160
        %p162 = scmp.lt.s32.totalorder %s161, 16
        %s163 = scalar_select %p162, %s161, 16
        %s164 = smul.u32 128, %s163
        %v165 = vld [vmem:[%s154] sm:$0xff]
        %v166 = vld [vmem:[%s154 + $0x8] sm:$0xff]
        %v167 = vld [vmem:[%s154 + $0x10] sm:$0xff]
        %v168 = vld [vmem:[%s154 + $0x18] sm:$0xff]
        %v169 = vld [vmem:[%s154 + $0x20] sm:$0xff]
        %v170 = vld [vmem:[%s154 + $0x28] sm:$0xff]
        %v171 = vld [vmem:[%s154 + $0x30] sm:$0xff]
        %v172 = vld [vmem:[%s154 + $0x38] sm:$0xff]
        %v173 = vld [vmem:[%s154 + $0x40] sm:$0xff]
        %v174 = vld [vmem:[%s154 + $0x48] sm:$0xff]
        %v175 = vld [vmem:[%s154 + $0x50] sm:$0xff]
        %v176 = vld [vmem:[%s154 + $0x58] sm:$0xff]
        %v177 = vld [vmem:[%s154 + $0x60] sm:$0xff]
        %v178 = vld [vmem:[%s154 + $0x68] sm:$0xff]
        %v179 = vld [vmem:[%s154 + $0x70] sm:$0xff]
        %v180 = vld [vmem:[%s154 + $0x78] sm:$0xff]
        %v181 = vld [vmem:[%s1] sm:$0xff]
        %v182 = vld [vmem:[%s1 + $0x8] sm:$0xff]
        %v183 = vld [vmem:[%s1 + $0x10] sm:$0xff]
        %v184 = vld [vmem:[%s1 + $0x18] sm:$0xff]
        %vm185 = vcmask 261120
        %v187 = vsel %vm185, %v165, 0
        %v190 = vsel %vm185, %v166, 0
        %v193 = vsel %vm185, %v167, 0
        %v196 = vsel %vm185, %v168, 0
        %v199 = vsel %vm185, %v169, 0
        %v202 = vsel %vm185, %v170, 0
        %v205 = vsel %vm185, %v171, 0
        %v208 = vsel %vm185, %v172, 0
        %v211 = vsel %vm185, %v173, 0
        %v214 = vsel %vm185, %v174, 0
        %v217 = vsel %vm185, %v175, 0
        %v220 = vsel %vm185, %v176, 0
        %v223 = vsel %vm185, %v177, 0
        %v226 = vsel %vm185, %v178, 0
        %v229 = vsel %vm185, %v179, 0
        %v232 = vsel %vm185, %v180, 0
        %234 = vmatprep.subr.mxu0 0.0
        %235 = vmatpush1.msra.mxu0 %v181
        %236 = vmatprep.subr.mxu0 0.0
        %237 = vmatpush1.msra.mxu0 %v182
        %238 = vmatprep.subr.mxu0 0.0
        %239 = vmatpush1.msra.mxu0 %v183
        %240 = vmatprep.subr.mxu0 0.0
        %241 = vmatpush1.msra.mxu0 %v184
        %242 = vmatprep.subr.mxu0 0.0
        %243 = vmatpush1.msra.mxu0 0.0
        %244 = vmatprep.subr.mxu0 0.0
        %245 = vmatpush1.msra.mxu0 0.0
        %246 = vmatprep.subr.mxu0 0.0
        %247 = vmatpush1.msra.mxu0 0.0
        %248 = vmatprep.subr.mxu0 0.0
        %249 = vmatpush1.msra.mxu0 0.0
        %250 = vmatprep.subr.mxu0 0.0
        %251 = vmatpush1.msra.mxu0 0.0
        %252 = vmatprep.subr.mxu0 0.0
        %253 = vmatpush1.msra.mxu0 0.0
        %254 = vmatprep.subr.mxu0 0.0
        %255 = vmatpush1.msra.mxu0 0.0
        %256 = vmatprep.subr.mxu0 0.0
        %257 = vmatpush1.msra.mxu0 0.0
        %258 = vmatprep.subr.mxu0 0.0
        %259 = vmatpush1.msra.mxu0 0.0
        %260 = vmatprep.subr.mxu0 0.0
        %261 = vmatpush1.msra.mxu0 0.0
        %262 = vmatprep.subr.mxu0 0.0
        %263 = vmatpush1.msra.mxu0 0.0
        %264 = vmatprep.subr.mxu0 0.0
        %265 = vmatpush1.msra.mxu0 0.0
        %266 = vmatprep.subr.mxu0 0.0
        %267 = vmatpush1.msra.mxu0 0.0
        %268 = vmatprep.subr.mxu0 0.0
        %269 = vmatpush1.msra.mxu0 0.0
        %270 = vmatprep.subr.mxu0 0.0
        %271 = vmatpush1.msra.mxu0 0.0
        %272 = vmatprep.subr.mxu0 0.0
        %273 = vmatpush1.msra.mxu0 0.0
        %274 = vmatprep.subr.mxu0 0.0
        %275 = vmatpush1.msra.mxu0 0.0
        %276 = vmatprep.subr.mxu0 0.0
        %277 = vmatpush1.msra.mxu0 0.0
        %278 = vmatprep.subr.mxu0 0.0
        %279 = vmatpush1.msra.mxu0 0.0
        %280 = vmatprep.subr.mxu0 0.0
        %281 = vmatpush1.msra.mxu0 0.0
        %282 = vmatprep.subr.mxu0 0.0
        %283 = vmatpush1.msra.mxu0 0.0
        %284 = vmatprep.subr.mxu0 0.0
        %285 = vmatpush1.msra.mxu0 0.0
        %286 = vmatprep.subr.mxu0 0.0
        %287 = vmatpush1.msra.mxu0 0.0
        %288 = vmatprep.subr.mxu0 0.0
        %289 = vmatpush1.msra.mxu0 0.0
        %290 = vmatprep.subr.mxu0 0.0
        %291 = vmatpush1.msra.mxu0 0.0
        %292 = vmatprep.subr.mxu0 0.0
        %293 = vmatpush1.msra.mxu0 0.0
        %294 = vmatprep.subr.mxu0 0.0
        %295 = vmatpush1.msra.mxu0 0.0
        %296 = vmatprep.subr.mxu0 0.0
        %297 = vmatpush1.msra.mxu0 0.0
        %298 = vmatprep.mubr.f32.mxu0 0.0
        %299 = vmatmul.mubr.f32.gmra.mrb[0].mxu0 %v187
        %v300 = vpop.f32.mrb[0].mxu0
        %v301 = vadd.f32 0.0, %v300
        %v302 = vpop.f32.mrb[0].mxu0
        %303 = vmatprep.mubr.f32.mxu0 0.0
        %304 = vmatmul.mubr.f32.gmra.mrb[0].mxu0 %v190
        %v305 = vpop.f32.mrb[0].mxu0
        %v306 = vadd.f32 0.0, %v305
        %v307 = vpop.f32.mrb[0].mxu0
        %308 = vmatprep.mubr.f32.mxu0 0.0
        %309 = vmatmul.mubr.f32.gmra.mrb[0].mxu0 %v193
        %v310 = vpop.f32.mrb[0].mxu0
        %v311 = vadd.f32 0.0, %v310
        %v312 = vpop.f32.mrb[0].mxu0
        %313 = vmatprep.mubr.f32.mxu0 0.0
        %314 = vmatmul.mubr.f32.gmra.mrb[0].mxu0 %v196
        %v315 = vpop.f32.mrb[0].mxu0
        %v316 = vadd.f32 0.0, %v315
        %v317 = vpop.f32.mrb[0].mxu0
        %318 = vmatprep.mubr.f32.mxu0 0.0
        %319 = vmatmul.mubr.f32.gmra.mrb[0].mxu0 %v199
        %v320 = vpop.f32.mrb[0].mxu0
        %v321 = vadd.f32 0.0, %v320
        %v322 = vpop.f32.mrb[0].mxu0
        %323 = vmatprep.mubr.f32.mxu0 0.0
        %324 = vmatmul.mubr.f32.gmra.mrb[0].mxu0 %v202
        %v325 = vpop.f32.mrb[0].mxu0
        %v326 = vadd.f32 0.0, %v325
        %v327 = vpop.f32.mrb[0].mxu0
        %328 = vmatprep.mubr.f32.mxu0 0.0
        %329 = vmatmul.mubr.f32.gmra.mrb[0].mxu0 %v205
        %v330 = vpop.f32.mrb[0].mxu0
        %v331 = vadd.f32 0.0, %v330
        %v332 = vpop.f32.mrb[0].mxu0
        %333 = vmatprep.mubr.f32.mxu0 0.0
        %334 = vmatmul.mubr.f32.gmra.mrb[0].mxu0 %v208
        %v335 = vpop.f32.mrb[0].mxu0
        %v336 = vadd.f32 0.0, %v335
        %v337 = vpop.f32.mrb[0].mxu0
        %338 = vmatprep.mubr.f32.mxu0 0.0
        %339 = vmatmul.mubr.f32.gmra.mrb[0].mxu0 %v211
        %v340 = vpop.f32.mrb[0].mxu0
        %v341 = vadd.f32 0.0, %v340
        %v342 = vpop.f32.mrb[0].mxu0
        %343 = vmatprep.mubr.f32.mxu0 0.0
        %344 = vmatmul.mubr.f32.gmra.mrb[0].mxu0 %v214
        %v345 = vpop.f32.mrb[0].mxu0
        %v346 = vadd.f32 0.0, %v345
        %v347 = vpop.f32.mrb[0].mxu0
        %348 = vmatprep.mubr.f32.mxu0 0.0
        %349 = vmatmul.mubr.f32.gmra.mrb[0].mxu0 %v217
        %v350 = vpop.f32.mrb[0].mxu0
        %v351 = vadd.f32 0.0, %v350
        %v352 = vpop.f32.mrb[0].mxu0
        %353 = vmatprep.mubr.f32.mxu0 0.0
        %354 = vmatmul.mubr.f32.gmra.mrb[0].mxu0 %v220
        %v355 = vpop.f32.mrb[0].mxu0
        %v356 = vadd.f32 0.0, %v355
        %v357 = vpop.f32.mrb[0].mxu0
        %358 = vmatprep.mubr.f32.mxu0 0.0
        %359 = vmatmul.mubr.f32.gmra.mrb[0].mxu0 %v223
        %v360 = vpop.f32.mrb[0].mxu0
        %v361 = vadd.f32 0.0, %v360
        %v362 = vpop.f32.mrb[0].mxu0
        %363 = vmatprep.mubr.f32.mxu0 0.0
        %364 = vmatmul.mubr.f32.gmra.mrb[0].mxu0 %v226
        %v365 = vpop.f32.mrb[0].mxu0
        %v366 = vadd.f32 0.0, %v365
        %v367 = vpop.f32.mrb[0].mxu0
        %368 = vmatprep.mubr.f32.mxu0 0.0
        %369 = vmatmul.mubr.f32.gmra.mrb[0].mxu0 %v229
        %v370 = vpop.f32.mrb[0].mxu0
        %v371 = vadd.f32 0.0, %v370
        %v372 = vpop.f32.mrb[0].mxu0
        %373 = vmatprep.mubr.f32.mxu0 0.0
        %374 = vmatmul.mubr.f32.gmra.mrb[0].mxu0 %v232
        %v375 = vpop.f32.mrb[0].mxu0
        %v376 = vadd.f32 0.0, %v375
        %v377 = vpop.f32.mrb[0].mxu0
        %378 = vdwg.mxu0
        %vm379 = vcmask 130048
        %380 = vst.msk [vmem:[%s145] sm:$0xff] %vm379, %v301
        %381 = vst.msk [vmem:[%s145 + $0x8] sm:$0xff] %vm379, %v306
        %382 = vst.msk [vmem:[%s145 + $0x10] sm:$0xff] %vm379, %v311
        %383 = vst.msk [vmem:[%s145 + $0x18] sm:$0xff] %vm379, %v316
        %384 = vst.msk [vmem:[%s145 + $0x20] sm:$0xff] %vm379, %v321
        %385 = vst.msk [vmem:[%s145 + $0x28] sm:$0xff] %vm379, %v326
        %386 = vst.msk [vmem:[%s145 + $0x30] sm:$0xff] %vm379, %v331
        %387 = vst.msk [vmem:[%s145 + $0x38] sm:$0xff] %vm379, %v336
        %388 = vst.msk [vmem:[%s145 + $0x40] sm:$0xff] %vm379, %v341
        %389 = vst.msk [vmem:[%s145 + $0x48] sm:$0xff] %vm379, %v346
        %390 = vst.msk [vmem:[%s145 + $0x50] sm:$0xff] %vm379, %v351
        %391 = vst.msk [vmem:[%s145 + $0x58] sm:$0xff] %vm379, %v356
        %392 = vst.msk [vmem:[%s145 + $0x60] sm:$0xff] %vm379, %v361
        %393 = vst.msk [vmem:[%s145 + $0x68] sm:$0xff] %vm379, %v366
        %394 = vst.msk [vmem:[%s145 + $0x70] sm:$0xff] %vm379, %v371
        %395 = vst.msk [vmem:[%s145 + $0x78] sm:$0xff] %vm379, %v376
        %s396 = sand.u32 %s68, 1
        %s397 = sand.u32 %s68, 1
        %s398 = smul.addr %s397, 128
        %s399 = scalar_lea.vmem [#allocation2], %s398
        // Predicated region
        $region29: #{tpu_custom_call.1} parent=27 // pred_check
          %p400 = pneg %p78
        $region30: #{tpu_custom_call.1} parent=27 // pred_check_branch
          %402 = sbr.rel (%p400) target = $region32
        $region31: #{tpu_custom_call.1} parent=27 // pred_region
          %s403 = smul.u32 16, %s13
          %s404 = ssub.s32 38, %s403
          %p405 = scmp.lt.s32.totalorder %s404, 16
          %s406 = scalar_select %p405, %s404, 16
          %s407 = smul.u32 128, %s406
          %p408 = scmp.ne.s32.totalorder 0, %s407
          %s409 = smul.addr %s403, 8
          %s410 = scalar_lea.vmem %s2, %s409
          // Predicated region
          $region33: #{tpu_custom_call.1} parent=31 // pred_check
            %p411 = pneg %p408
          $region34: #{tpu_custom_call.1} parent=31 // pred_check_branch
            %413 = sbr.rel (%p411) target = $region36
          $region35: #{tpu_custom_call.1} parent=31 // pred_region
            // Predicated region
            $region37: #{tpu_custom_call.1} parent=35 // pred_check
              _
            $region38: #{tpu_custom_call.1} parent=35 // pred_check_branch
              %415 = sbr.rel (0) target = $region40
            $region39: #{tpu_custom_call.1} parent=35 // pred_region
              // Predicated region
              $region59: #{tpu_custom_call.1} parent=39 // pred_check
                _
              $region60: #{tpu_custom_call.1} parent=39 // pred_check_branch
                %494 = sbr.rel (0) target = $region62
              $region61: #{tpu_custom_call.1} parent=39 // pred_region
                %s495 = sshrl.u32 %s406, 4
                // While loop
                $region63: #{tpu_custom_call.1} parent=61 // loop_pre_header
                  _
                $region64: #{tpu_custom_call.1} parent=61 // loop_header
                  %s497 = sphi 0, %s499
                  %p498 = scmp.ge.s32.totalorder %s497, %s495
                  %s502 = sphi 0, %s539
                  %s503 = sphi %s399, %s542
                  %s504 = sphi %s410, %s543
                $region65: #{tpu_custom_call.1} parent=61 // loop_header_branch
                  %501 = sbr.rel (%p498) target = $region69
                $region66: #{tpu_custom_call.1} parent=61 // loop_body
                  %v505 = vld [vmem:[%s503] sm:$0xff]
                  %506 = vst [vmem:[%s504] sm:$0xff] %v505
                  %v507 = vld [vmem:[%s503 + $0x8] sm:$0xff]
                  %508 = vst [vmem:[%s504 + $0x8] sm:$0xff] %v507
                  %v509 = vld [vmem:[%s503 + $0x10] sm:$0xff]
                  %510 = vst [vmem:[%s504 + $0x10] sm:$0xff] %v509
                  %v511 = vld [vmem:[%s503 + $0x18] sm:$0xff]
                  %512 = vst [vmem:[%s504 + $0x18] sm:$0xff] %v511
                  %v513 = vld [vmem:[%s503 + $0x20] sm:$0xff]
                  %514 = vst [vmem:[%s504 + $0x20] sm:$0xff] %v513
                  %v515 = vld [vmem:[%s503 + $0x28] sm:$0xff]
                  %516 = vst [vmem:[%s504 + $0x28] sm:$0xff] %v515
                  %v517 = vld [vmem:[%s503 + $0x30] sm:$0xff]
                  %518 = vst [vmem:[%s504 + $0x30] sm:$0xff] %v517
                  %v519 = vld [vmem:[%s503 + $0x38] sm:$0xff]
                  %520 = vst [vmem:[%s504 + $0x38] sm:$0xff] %v519
                  %v521 = vld [vmem:[%s503 + $0x40] sm:$0xff]
                  %522 = vst [vmem:[%s504 + $0x40] sm:$0xff] %v521
                  %v523 = vld [vmem:[%s503 + $0x48] sm:$0xff]
                  %524 = vst [vmem:[%s504 + $0x48] sm:$0xff] %v523
                  %v525 = vld [vmem:[%s503 + $0x50] sm:$0xff]
                  %526 = vst [vmem:[%s504 + $0x50] sm:$0xff] %v525
                  %v527 = vld [vmem:[%s503 + $0x58] sm:$0xff]
                  %528 = vst [vmem:[%s504 + $0x58] sm:$0xff] %v527
                  %v529 = vld [vmem:[%s503 + $0x60] sm:$0xff]
                  %530 = vst [vmem:[%s504 + $0x60] sm:$0xff] %v529
                  %v531 = vld [vmem:[%s503 + $0x68] sm:$0xff]
                  %532 = vst [vmem:[%s504 + $0x68] sm:$0xff] %v531
                  %v533 = vld [vmem:[%s503 + $0x70] sm:$0xff]
                  %534 = vst [vmem:[%s504 + $0x70] sm:$0xff] %v533
                  %v535 = vld [vmem:[%s503 + $0x78] sm:$0xff]
                  %536 = vst [vmem:[%s504 + $0x78] sm:$0xff] %v535
                  %s537 = sadd.s32 1, %s502
                  %p538 = scmp.ge.s32.totalorder %s537, %s495
                  %s539 = scalar_select %p538, 0, %s537
                  %s540 = smul.u32 %s539, 128
                  %s541 = smul.u32 %s539, 128
                  %s542 = scalar_lea.vmem %s399, %s540 [#allocation2]
                  %s543 = scalar_lea.vmem %s410, %s541
                $region67: #{tpu_custom_call.1} parent=61 // loop_footer
                  %s499 = sadd.s32 %s497, 1
                $region68: #{tpu_custom_call.1} parent=61 // loop_footer_branch
                  %496 = sbr.rel target = $region64
                $region69: #{tpu_custom_call.1} parent=61 // loop_exit
                  _
                %s544 = sshrl.u32 %s406, 4
                %s545 = sand.u32 %s406, 15
                %s546 = smul.u32 %s544, 16
                %s547 = smul.u32 8, %s546
                %s548 = scalar_lea.vmem %s399, %s547 [#allocation2]
                %s549 = smul.u32 8, %s546
                %s550 = scalar_lea.vmem %s410, %s549
                // While loop
                $region70: #{tpu_custom_call.1} parent=61 // loop_pre_header
                  _
                $region71: #{tpu_custom_call.1} parent=61 // loop_header
                  %s552 = sphi 0, %s554
                  %p553 = scmp.ge.s32.totalorder %s552, %s545
                  %s557 = sphi 0, %s564
                  %s558 = sphi %s548, %s567
                  %s559 = sphi %s550, %s568
                $region72: #{tpu_custom_call.1} parent=61 // loop_header_branch
                  %556 = sbr.rel (%p553) target = $region76
                $region73: #{tpu_custom_call.1} parent=61 // loop_body
                  %v560 = vld [vmem:[%s558] sm:$0xff]
                  %561 = vst [vmem:[%s559] sm:$0xff] %v560
                  %s562 = sadd.s32 1, %s557
                  %p563 = scmp.ge.s32.totalorder %s562, %s545
                  %s564 = scalar_select %p563, 0, %s562
                  %s565 = smul.u32 %s564, 8
                  %s566 = smul.u32 %s564, 8
                  %s567 = scalar_lea.vmem %s548, %s565 [#allocation2]
                  %s568 = scalar_lea.vmem %s550, %s566
                $region74: #{tpu_custom_call.1} parent=61 // loop_footer
                  %s554 = sadd.s32 %s552, 1
                $region75: #{tpu_custom_call.1} parent=61 // loop_footer_branch
                  %551 = sbr.rel target = $region71
                $region76: #{tpu_custom_call.1} parent=61 // loop_exit
                  _
              $region62: #{tpu_custom_call.1} parent=39 // pred_fallthru
                _
              // Predicated region
              $region77: #{tpu_custom_call.1} parent=39 // pred_check
                _
              $region78: #{tpu_custom_call.1} parent=39 // pred_check_branch
                %570 = sbr.rel target = $region80
              $region79: #{tpu_custom_call.1} parent=39 // pred_region
                _
              $region80: #{tpu_custom_call.1} parent=39 // pred_fallthru
                _
            $region40: #{tpu_custom_call.1} parent=35 // pred_fallthru
              _
            // Predicated region
            $region41: #{tpu_custom_call.1} parent=35 // pred_check
              _
            $region42: #{tpu_custom_call.1} parent=35 // pred_check_branch
              %417 = sbr.rel target = $region44
            $region43: #{tpu_custom_call.1} parent=35 // pred_region
              %s419 = sshrl.u32 %s406, 4
              // While loop
              $region45: #{tpu_custom_call.1} parent=43 // loop_pre_header
                _
              $region46: #{tpu_custom_call.1} parent=43 // loop_header
                %s421 = sphi 0, %s423
                %p422 = scmp.ge.s32.totalorder %s421, %s419
                %s426 = sphi 0, %s463
                %s427 = sphi %s399, %s466
                %s428 = sphi %s410, %s467
              $region47: #{tpu_custom_call.1} parent=43 // loop_header_branch
                %425 = sbr.rel (%p422) target = $region51
              $region48: #{tpu_custom_call.1} parent=43 // loop_body
                %v429 = vld [vmem:[%s427] sm:$0xff]
                %430 = vst [vmem:[%s428] sm:$0xff] %v429
                %v431 = vld [vmem:[%s427 + $0x8] sm:$0xff]
                %432 = vst [vmem:[%s428 + $0x8] sm:$0xff] %v431
                %v433 = vld [vmem:[%s427 + $0x10] sm:$0xff]
                %434 = vst [vmem:[%s428 + $0x10] sm:$0xff] %v433
                %v435 = vld [vmem:[%s427 + $0x18] sm:$0xff]
                %436 = vst [vmem:[%s428 + $0x18] sm:$0xff] %v435
                %v437 = vld [vmem:[%s427 + $0x20] sm:$0xff]
                %438 = vst [vmem:[%s428 + $0x20] sm:$0xff] %v437
                %v439 = vld [vmem:[%s427 + $0x28] sm:$0xff]
                %440 = vst [vmem:[%s428 + $0x28] sm:$0xff] %v439
                %v441 = vld [vmem:[%s427 + $0x30] sm:$0xff]
                %442 = vst [vmem:[%s428 + $0x30] sm:$0xff] %v441
                %v443 = vld [vmem:[%s427 + $0x38] sm:$0xff]
                %444 = vst [vmem:[%s428 + $0x38] sm:$0xff] %v443
                %v445 = vld [vmem:[%s427 + $0x40] sm:$0xff]
                %446 = vst [vmem:[%s428 + $0x40] sm:$0xff] %v445
                %v447 = vld [vmem:[%s427 + $0x48] sm:$0xff]
                %448 = vst [vmem:[%s428 + $0x48] sm:$0xff] %v447
                %v449 = vld [vmem:[%s427 + $0x50] sm:$0xff]
                %450 = vst [vmem:[%s428 + $0x50] sm:$0xff] %v449
                %v451 = vld [vmem:[%s427 + $0x58] sm:$0xff]
                %452 = vst [vmem:[%s428 + $0x58] sm:$0xff] %v451
                %v453 = vld [vmem:[%s427 + $0x60] sm:$0xff]
                %454 = vst [vmem:[%s428 + $0x60] sm:$0xff] %v453
                %v455 = vld [vmem:[%s427 + $0x68] sm:$0xff]
                %456 = vst [vmem:[%s428 + $0x68] sm:$0xff] %v455
                %v457 = vld [vmem:[%s427 + $0x70] sm:$0xff]
                %458 = vst [vmem:[%s428 + $0x70] sm:$0xff] %v457
                %v459 = vld [vmem:[%s427 + $0x78] sm:$0xff]
                %460 = vst [vmem:[%s428 + $0x78] sm:$0xff] %v459
                %s461 = sadd.s32 1, %s426
                %p462 = scmp.ge.s32.totalorder %s461, %s419
                %s463 = scalar_select %p462, 0, %s461
                %s464 = smul.u32 %s463, 128
                %s465 = smul.u32 %s463, 128
                %s466 = scalar_lea.vmem %s399, %s464 [#allocation2]
                %s467 = scalar_lea.vmem %s410, %s465
              $region49: #{tpu_custom_call.1} parent=43 // loop_footer
                %s423 = sadd.s32 %s421, 1
              $region50: #{tpu_custom_call.1} parent=43 // loop_footer_branch
                %420 = sbr.rel target = $region46
              $region51: #{tpu_custom_call.1} parent=43 // loop_exit
                _
              %s468 = sshrl.u32 %s406, 4
              %s469 = sand.u32 %s406, 15
              %s470 = smul.u32 %s468, 16
              %s471 = smul.u32 8, %s470
              %s472 = scalar_lea.vmem %s399, %s471 [#allocation2]
              %s473 = smul.u32 8, %s470
              %s474 = scalar_lea.vmem %s410, %s473
              // While loop
              $region52: #{tpu_custom_call.1} parent=43 // loop_pre_header
                _
              $region53: #{tpu_custom_call.1} parent=43 // loop_header
                %s476 = sphi 0, %s478
                %p477 = scmp.ge.s32.totalorder %s476, %s469
                %s481 = sphi 0, %s488
                %s482 = sphi %s472, %s491
                %s483 = sphi %s474, %s492
              $region54: #{tpu_custom_call.1} parent=43 // loop_header_branch
                %480 = sbr.rel (%p477) target = $region58
              $region55: #{tpu_custom_call.1} parent=43 // loop_body
                %v484 = vld [vmem:[%s482] sm:$0xff]
                %485 = vst [vmem:[%s483] sm:$0xff] %v484
                %s486 = sadd.s32 1, %s481
                %p487 = scmp.ge.s32.totalorder %s486, %s469
                %s488 = scalar_select %p487, 0, %s486
                %s489 = smul.u32 %s488, 8
                %s490 = smul.u32 %s488, 8
                %s491 = scalar_lea.vmem %s472, %s489 [#allocation2]
                %s492 = scalar_lea.vmem %s474, %s490
              $region56: #{tpu_custom_call.1} parent=43 // loop_footer
                %s478 = sadd.s32 %s476, 1
              $region57: #{tpu_custom_call.1} parent=43 // loop_footer_branch
                %475 = sbr.rel target = $region53
              $region58: #{tpu_custom_call.1} parent=43 // loop_exit
                _
            $region44: #{tpu_custom_call.1} parent=35 // pred_fallthru
              _
          $region36: #{tpu_custom_call.1} parent=31 // pred_fallthru
            _
          %571 = vnop
        $region32: #{tpu_custom_call.1} parent=27 // pred_fallthru
          _
      $region28: #{tpu_custom_call.1} parent=5 // pred_fallthru
        _
      %p572 = scmp.le.s32.totalorder 2, %s8
      // Predicated region
      $region81: #{tpu_custom_call.1} parent=5 // pred_check
        %p573 = pneg %p572
      $region82: #{tpu_custom_call.1} parent=5 // pred_check_branch
        %575 = sbr.rel (%p573) target = $region84
      $region83: #{tpu_custom_call.1} parent=5 // pred_region
        %s576 = ssub.s32 %s8, 2
        // Predicated region
        $region85: #{tpu_custom_call.1} parent=83 // pred_check
          %p577 = pneg %p84
        $region86: #{tpu_custom_call.1} parent=83 // pred_check_branch
          %579 = sbr.rel (%p577) target = $region88
        $region87: #{tpu_custom_call.1} parent=83 // pred_region
          %s580 = sand.u32 %s69, 1
          %s581 = sand.u32 %s69, 1
          %s582 = smul.addr %s581, 128
          %s583 = scalar_lea.vmem [#allocation2], %s582
        $region88: #{tpu_custom_call.1} parent=83 // pred_fallthru
          _
      $region84: #{tpu_custom_call.1} parent=5 // pred_fallthru
        _
    $region6: #{tpu_custom_call.1} parent=1 // loop_footer
      %s12 = sadd.s32 1, %s8
    $region7: #{tpu_custom_call.1} parent=1 // loop_footer_branch
      %7 = sbr.rel target = $region3
    $region8: #{tpu_custom_call.1} parent=1 // loop_exit
      _

</llo_original>
